<compile_context>
chip_gen: v7x
topology: tpu7x:2x2x1
jax: 0.10.0
libtpu: 0.0.40
codegen_flags: <defaults>
</compile_context>

<pallas_src>
import jax
import jax.numpy as jnp
from jax.experimental import pallas as pl
from jax.experimental.pallas import tpu as pltpu


def _round_up(x, m):
    return (x + m - 1) // m * m


def _matmul_bias_kernel(p_ref, w_ref, b_ref, o_ref):
    # p_ref: (tm, K) bf16 patch tile; w_ref: (K, Np) bf16 flattened conv
    # weight; b_ref: (1, Np) f32 bias. f32 accumulation on the MXU, f32
    # epilogue, store in o_ref.dtype (bf16 by default).
    acc = jnp.dot(p_ref[...], w_ref[...], preferred_element_type=jnp.float32)
    o_ref[...] = (acc + b_ref[...]).astype(o_ref.dtype)


def _im2col(x, kernel, stride, padding):
    """Extract conv patches (x already in compute dtype). Feature order is
    (c, ki, kj), matching PyTorch's Conv2d weight (C_out, C_in, kh, kw)
    flattened along its last three dims."""
    B, C, H, W = x.shape
    kh, kw = kernel
    sh, sw = stride
    ph, pw = padding
    xp = jnp.pad(x, ((0, 0), (0, 0), (ph, ph), (pw, pw)))
    Ho = (H + 2 * ph - kh) // sh + 1
    Wo = (W + 2 * pw - kw) // sw + 1
    cols = []
    for i in range(kh):
        for j in range(kw):
            cols.append(xp[:, :, i:i + sh * Ho:sh, j:j + sw * Wo:sw])  # (B,C,Ho,Wo)
    p = jnp.stack(cols, axis=0)             # (kh*kw, B, C, Ho, Wo)
    p = p.transpose(1, 3, 4, 2, 0)          # (B, Ho, Wo, C, kh*kw)
    p = p.reshape(B, Ho * Wo, C * kh * kw)  # feature index = c*(kh*kw) + i*kw + j
    return p, Ho, Wo


def patch_embed_forward(x, weight, bias, kernel, stride, padding, mask=None,
                        tm=2048, compute_dtype=jnp.bfloat16,
                        out_dtype=jnp.bfloat16, lane=128,
                        allow_input_fusion=False):
    """Equivalent of PatchEmbed.forward: masked conv -> flatten -> transpose.

    x: (B, C_in, H, W); weight: (C_out, C_in, kh, kw); bias: (C_out,)
    Returns (B, H_out*W_out, C_out) in `out_dtype` (bf16 by default).

    Note: the contraction runs with bf16 inputs and f32 accumulation, so the
    result differs from a PyTorch f32 Conv2d by bf16 input quantization.
    """
    # Cast once to the compute dtype, then apply the (optional) mask in that
    # dtype -- avoids a separate full-input f32 read/write pass.
    xc = x.astype(compute_dtype)
    if mask is not None:
        # do_masked_conv: mask is nearest-resized to x's spatial dims
        # (PyTorch get_resized_mask), then the input is zeroed before the conv.
        mask = mask.astype(compute_dtype)
        if mask.shape[-2:] != x.shape[-2:]:
            mask = jax.image.resize(
                mask, mask.shape[:-2] + x.shape[-2:], method="nearest")
        xc = xc * mask

    patches, Ho, Wo = _im2col(xc, kernel, stride, padding)
    B, L, K = patches.shape
    N = weight.shape[0]

    # Only N is padded (to 128) so the output store is lane-dense. K and M are
    # left unpadded in HBM; Mosaic pads K inside VMEM and Pallas masks the
    # edge M tile's stores.
    Np = _round_up(N, lane)

    # M tile: multiple of 128, default 2048, but keep >= ~4 grid steps so the
    # "parallel" axis can shard across v7x's two TensorCores and the pipeline
    # still overlaps DMA with compute.
    M = B * L
    tm = _round_up(max(tm, 128), 128)
    tm_eff = max(128, min(tm, _round_up(-(-M // 4), 128)))
    grid_m = pl.cdiv(M, tm_eff)

    patches2 = patches.reshape(M, K)                                   # (M, K) bf16, no copy
    w_flat = weight.reshape(N, K).T.astype(compute_dtype)
    w_flat = jnp.pad(w_flat, ((0, 0), (0, Np - N)))                    # (K, Np) bf16
    b2 = jnp.pad(bias.astype(jnp.float32), (0, Np - N)).reshape(1, Np)  # (1, Np) f32

    cp_kwargs = dict(dimension_semantics=("parallel",))
    if allow_input_fusion:
        # Opt-in: let XLA fuse the im2col producer into the Pallas input DMA.
        cp_kwargs["allow_input_fusion"] = [0]

    out = pl.pallas_call(
        _matmul_bias_kernel,
        out_shape=jax.ShapeDtypeStruct((M, Np), out_dtype),
        grid_spec=pltpu.PrefetchScalarGridSpec(
            num_scalar_prefetch=0,
            grid=(grid_m,),
            in_specs=[
                pl.BlockSpec((tm_eff, K), lambda i: (i, 0)),   # full-extent K
                pl.BlockSpec((K, Np), lambda i: (0, 0)),       # grid-invariant weight
                pl.BlockSpec((1, Np), lambda i: (0, 0)),       # grid-invariant bias
            ],
            out_specs=pl.BlockSpec((tm_eff, Np), lambda i: (i, 0)),
        ),
        compiler_params=pltpu.CompilerParams(**cp_kwargs),
    )(patches2, w_flat, b2)

    # Slice the padded output columns back off and restore (B, L, C_out).
    return out[:, :N].reshape(B, L, N)


if __name__ == "__main__":
    # Small Hiera-like config: dim_in=4, dim_out=32, kernel=(7,7), stride=(4,4), pad=(3,3)
    B, C_in, H, W = 2, 4, 16, 16
    dim_out = 32
    kernel, stride, padding = (7, 7), (4, 4), (3, 3)

    key = jax.random.PRNGKey(0)
    kx, kw_, kb, km = jax.random.split(key, 4)
    x = jax.random.normal(kx, (B, C_in, H, W), dtype=jnp.float32)
    # Deterministic synthetic parameters (Conv2d weight: (C_out, C_in, kh, kw), bias: (C_out,))
    weight = jax.random.normal(kw_, (dim_out, C_in) + kernel, dtype=jnp.float32) * 0.05
    bias = jax.random.normal(kb, (dim_out,), dtype=jnp.float32) * 0.05

    def ref_forward(x_in):
        # Plain-JAX f32 conv reference (same semantics as the PyTorch module).
        r = jax.lax.conv_general_dilated(
            x_in, weight, window_strides=stride,
            padding=[(padding[0], padding[0]), (padding[1], padding[1])],
            dimension_numbers=("NCHW", "OIHW", "NCHW"))
        r = r + bias.reshape(1, -1, 1, 1)
        return r.reshape(B, dim_out, -1).transpose(0, 2, 1)  # (B, L, C_out)

    # Unmasked path. Tolerance accounts for bf16 inputs/outputs with f32 accumulation.
    out = patch_embed_forward(x, weight, bias, kernel, stride, padding, mask=None)
    out = jax.block_until_ready(out)
    ref = ref_forward(x)
    assert out.shape == ref.shape == (B, 4 * 4, dim_out)
    assert jnp.allclose(out.astype(jnp.float32), ref, atol=2e-2, rtol=2e-2)

    # Masked path: 4x4 token mask, nearest-resized to the input resolution.
    mask = (jax.random.uniform(km, (B, 1, 4, 4)) > 0.3).astype(jnp.float32)
    mask_full = jax.image.resize(mask, (B, 1, H, W), method="nearest")
    out_m = patch_embed_forward(x, weight, bias, kernel, stride, padding, mask=mask)
    out_m = jax.block_until_ready(out_m)
    ref_m = ref_forward(x * mask_full)
    assert out_m.shape == ref_m.shape
    assert jnp.allclose(out_m.astype(jnp.float32), ref_m, atol=2e-2, rtol=2e-2)

    print("KERNEL_OK")
</pallas_src>

<mosaic_0001>
module attributes {stable_mosaic.version = 11 : i64} {
  func.func @_matmul_bias_kernel(%arg0: i32, %arg1: memref<128x196xbf16, #tpu.memory_space<vmem>>, %arg2: memref<196x128xbf16, #tpu.memory_space<vmem>>, %arg3: memref<1x128xf32, #tpu.memory_space<vmem>>, %arg4: memref<128x128xbf16, #tpu.memory_space<vmem>>) attributes {dimension_semantics = [#tpu.dimension_semantics<parallel>], iteration_bounds = array<i64: 1>, scalar_prefetch = 0 : i64, scratch_operands = 0 : i64, tpu.core_type = #tpu.core_type<tc>, window_params = [{transform_indices = @transform_0, window_bounds = array<i64: 128, 196>}, {pipeline_mode = #tpu.pipeline_mode<synchronous>, transform_indices = @transform_1, window_bounds = array<i64: 196, 128>}, {pipeline_mode = #tpu.pipeline_mode<synchronous>, transform_indices = @transform_2, window_bounds = array<i64: 1, 128>}, {transform_indices = @transform_3, window_bounds = array<i64: 128, 128>}]} {
    %c0 = arith.constant 0 : index
    %c0_0 = arith.constant 0 : index
    %0 = vector.load %arg1[%c0, %c0_0] : memref<128x196xbf16, #tpu.memory_space<vmem>>, vector<128x196xbf16>
    %c0_1 = arith.constant 0 : index
    %c0_2 = arith.constant 0 : index
    %1 = vector.load %arg2[%c0_1, %c0_2] : memref<196x128xbf16, #tpu.memory_space<vmem>>, vector<196x128xbf16>
    %cst = arith.constant dense<0.000000e+00> : vector<128x128xf32>
    %2 = tpu.matmul %0, %1, %cst {dimension_numbers = #tpu.dot_dimension_numbers<[1], [0], [0], [1], [0, 0, 1, 1], [], []>} : vector<128x196xbf16>, vector<196x128xbf16>, vector<128x128xf32> -> vector<128x128xf32>
    %c0_3 = arith.constant 0 : index
    %c0_4 = arith.constant 0 : index
    %3 = vector.load %arg3[%c0_3, %c0_4] : memref<1x128xf32, #tpu.memory_space<vmem>>, vector<1x128xf32>
    %4 = vector.broadcast %3 : vector<1x128xf32> to vector<128x128xf32>
    %5 = arith.addf %2, %4 : vector<128x128xf32>
    %6 = arith.truncf %5 : vector<128x128xf32> to vector<128x128xbf16>
    %c0_5 = arith.constant 0 : index
    %c0_6 = arith.constant 0 : index
    %7 = vector.load %arg4[%c0_5, %c0_6] : memref<128x128xbf16, #tpu.memory_space<vmem>>, vector<128x128xbf16>
    tpu.vector_store %arg4[%c0_5, %c0_6], %6 {strides = array<i32>} : memref<128x128xbf16, #tpu.memory_space<vmem>>, vector<128x128xbf16>,
    return
  }
  func.func @transform_0(%arg0: i32) -> (i32, i32) {
    %c0_i32 = arith.constant 0 : i32
    %c0_i32_0 = arith.constant 0 : i32
    return %arg0, %c0_i32 : i32, i32
  }
  func.func @transform_1(%arg0: i32) -> (i32, i32) {
    %c0_i32 = arith.constant 0 : i32
    %c0_i32_0 = arith.constant 0 : i32
    %c0_i32_1 = arith.constant 0 : i32
    return %c0_i32, %c0_i32_0 : i32, i32
  }
  func.func @transform_2(%arg0: i32) -> (i32, i32) {
    %c0_i32 = arith.constant 0 : i32
    %c0_i32_0 = arith.constant 0 : i32
    %c0_i32_1 = arith.constant 0 : i32
    return %c0_i32, %c0_i32_0 : i32, i32
  }
  func.func @transform_3(%arg0: i32) -> (i32, i32) {
    %c0_i32 = arith.constant 0 : i32
    %c0_i32_0 = arith.constant 0 : i32
    return %arg0, %c0_i32 : i32, i32
  }
}

</mosaic_0001>

<llo_original>
// kernel: tpu_custom_call.1
$region0: #{tpu_custom_call.1}
  #allocation0 [shape = 'u32[]', space=smem, size = 0x4, offset = 0x4, fixed_abs, tag = 'smem constant byte address 0x4 - core index']
  #allocation1 [shape = 'u32[144,128]{1,0:T(1,128)}', space=vmem, size = 0x12000, scoped, tag = 'internal scratch']
  %s0 = inlined_call_operand.hbm [shape: bf16[32,196], index: 0, kind: input, shape index: {}]
  %s1 = inlined_call_operand.hbm [shape: bf16[196,128], index: 1, kind: input, shape index: {}]
  %s2 = inlined_call_operand.vmem [shape: f32[1,128], index: 2, kind: input, shape index: {}]
  %s3 = inlined_call_operand.hbm [shape: bf16[32,128], index: 3, kind: output, shape index: {}]
  %s4 = sld [smem:[#allocation0]]
  $region30: #{tpu_custom_call.1} parent=0
    _
  %s6 = ssub.s32 1, %s4
  %s7 = scalar_select 0, %s6, %s4
  $region1: #{tpu_custom_call.1} parent=0
    #allocation2 [shape = 'u8[65536]{0}', space=vmem, size = 0x10000, scoped, tag = 'input window, operand 0, single buffered']
    #allocation3 [shape = 's32[1]{0}', space=sflag, size = 0x4, scoped, tag = 'scoped memory for tpu_custom_call.1']
    #allocation4 [shape = 's32[1]{0}', space=sflag, size = 0x4, scoped, tag = 'scoped memory for tpu_custom_call.1']
    #allocation5 [shape = 'u8[51200]{0}', space=vmem, size = 0xc800, scoped, tag = 'input window, operand 1, single buffered']
    #allocation6 [shape = 's32[1]{0}', space=sflag, size = 0x4, scoped, tag = 'scoped memory for tpu_custom_call.1']
    #allocation7 [shape = 'u8[32768]{0}', space=vmem, size = 0x8000, scoped, tag = 'output window, operand 0, single buffered']
    %8 = vsyncpa [#allocation3], 0
    %9 = vsyncpa [#allocation6], 0
    %10 = vsyncpa [#allocation4], 0
    // Predicated region
    $region2: #{tpu_custom_call.1} parent=1 // pred_check
      _
    $region3: #{tpu_custom_call.1} parent=1 // pred_check_branch
      %12 = sbr.rel (0) target = $region5
    $region4: #{tpu_custom_call.1} parent=1 // pred_region
      %s14 = ssub.s32 2048, 512
      %15 = vsyncadd [#allocation3], %s14
      %s16 = sshll.u32 [#allocation2], 4
      %s17 = int_to_ptr.vmem [resolvable:$true] %s16
      %22 = dma.hbm_to_vmem [thread:$0]  %s0, 512, %s17, [#allocation3], 128, 128, 8
    $region5: #{tpu_custom_call.1} parent=1 // pred_fallthru
      _
    // Predicated region
    $region6: #{tpu_custom_call.1} parent=1 // pred_check
      _
    $region7: #{tpu_custom_call.1} parent=1 // pred_check_branch
      %24 = sbr.rel (0) target = $region9
    $region8: #{tpu_custom_call.1} parent=1 // pred_region
      %s26 = ssub.s32 1600, 1600
      %27 = vsyncadd [#allocation6], %s26
      %s28 = sshll.u32 [#allocation5], 4
      %s29 = int_to_ptr.vmem [resolvable:$true] %s28
      %34 = dma.hbm_to_vmem [thread:$0]  %s1, 1600, %s29, [#allocation6], 64, 64, 4
    $region9: #{tpu_custom_call.1} parent=1 // pred_fallthru
      _
    // Predicated region
    $region10: #{tpu_custom_call.1} parent=1 // pred_check
      _
    $region11: #{tpu_custom_call.1} parent=1 // pred_check_branch
      %36 = sbr.rel (0) target = $region13
    $region12: #{tpu_custom_call.1} parent=1 // pred_region
      _
    $region13: #{tpu_custom_call.1} parent=1 // pred_fallthru
      _
    // Predicated region
    $region14: #{tpu_custom_call.1} parent=1 // pred_check
      _
    $region15: #{tpu_custom_call.1} parent=1 // pred_check_branch
      %38 = sbr.rel (0) target = $region17
    $region16: #{tpu_custom_call.1} parent=1 // pred_region
      %39 = dma.done [#allocation3], 2048
    $region17: #{tpu_custom_call.1} parent=1 // pred_fallthru
      _
    // Predicated region
    $region18: #{tpu_custom_call.1} parent=1 // pred_check
      _
    $region19: #{tpu_custom_call.1} parent=1 // pred_check_branch
      %41 = sbr.rel (0) target = $region21
    $region20: #{tpu_custom_call.1} parent=1 // pred_region
      %42 = dma.done [#allocation6], 1600
    $region21: #{tpu_custom_call.1} parent=1 // pred_fallthru
      _
    %v44 = vld [vmem:[#allocation2] sm:$0xff]
    %v45 = vld [vmem:[#allocation2 + $0x8] sm:$0xff]
    %v46 = vld [vmem:[#allocation2 + $0x10] sm:$0xff]
    %v47 = vld [vmem:[#allocation2 + $0x18] sm:$0xff]
    %v48 = vld [vmem:[#allocation2 + $0x20] sm:$0xff]
    %v49 = vld [vmem:[#allocation2 + $0x28] sm:$0xff]
    %v50 = vld [vmem:[#allocation2 + $0x30] sm:$0xff]
    %v51 = vld [vmem:[#allocation2 + $0x38] sm:$0xff]
    %v52 = vld [vmem:[#allocation2 + $0x40] sm:$0xff]
    %v53 = vld [vmem:[#allocation2 + $0x48] sm:$0xff]
    %v54 = vld [vmem:[#allocation2 + $0x50] sm:$0xff]
    %v55 = vld [vmem:[#allocation2 + $0x58] sm:$0xff]
    %v56 = vld [vmem:[#allocation2 + $0x60] sm:$0xff]
    %v57 = vld [vmem:[#allocation2 + $0x68] sm:$0xff]
    %v58 = vld [vmem:[#allocation2 + $0x70] sm:$0xff]
    %v59 = vld [vmem:[#allocation2 + $0x78] sm:$0xff]
    %v60 = vld [vmem:[#allocation5] sm:$0xf]
    %v61 = vld [vmem:[#allocation5 + $0x4] sm:$0xf]
    %v62 = vld [vmem:[#allocation5 + $0x8] sm:$0xf]
    %v63 = vld [vmem:[#allocation5 + $0xc] sm:$0xf]
    %v64 = vld [vmem:[#allocation5 + $0x10] sm:$0xf]
    %v65 = vld [vmem:[#allocation5 + $0x14] sm:$0xf]
    %v66 = vld [vmem:[#allocation5 + $0x18] sm:$0xf]
    %v67 = vld [vmem:[#allocation5 + $0x1c] sm:$0xf]
    %v68 = vld [vmem:[#allocation5 + $0x20] sm:$0xf]
    %v69 = vld [vmem:[#allocation5 + $0x24] sm:$0xf]
    %v70 = vld [vmem:[#allocation5 + $0x28] sm:$0xf]
    %v71 = vld [vmem:[#allocation5 + $0x2c] sm:$0xf]
    %v72 = vld [vmem:[#allocation5 + $0x30] sm:$0xf]
    %v73 = vld [vmem:[#allocation5 + $0x34] sm:$0xf]
    %v74 = vld [vmem:[#allocation5 + $0x38] sm:$0xf]
    %v75 = vld [vmem:[#allocation5 + $0x3c] sm:$0xf]
    %v76 = vld [vmem:[#allocation5 + $0x40] sm:$0xf]
    %v77 = vld [vmem:[#allocation5 + $0x44] sm:$0xf]
    %v78 = vld [vmem:[#allocation5 + $0x48] sm:$0xf]
    %v79 = vld [vmem:[#allocation5 + $0x4c] sm:$0xf]
    %v80 = vld [vmem:[#allocation5 + $0x50] sm:$0xf]
    %v81 = vld [vmem:[#allocation5 + $0x54] sm:$0xf]
    %v82 = vld [vmem:[#allocation5 + $0x58] sm:$0xf]
    %v83 = vld [vmem:[#allocation5 + $0x5c] sm:$0xf]
    %v84 = vld [vmem:[#allocation5 + $0x60] sm:$0x3]
    %v85 = vld [vmem:[%s2] sm:$0x1]
    %v87 = vlaneseq
    %v88 = vshrl.u32 %v87, 7
    %v89 = vsub.s32 0, %v88
    %v90 = vrot.slane %v85, %v89
    %v108 = vunpack.c.l.b16 %v44
    %v109 = vunpack.c.h.b16 %v44
    %v110 = vunpack.c.l.b16 %v45
    %v111 = vunpack.c.h.b16 %v45
    %v112 = vunpack.c.l.b16 %v46
    %v113 = vunpack.c.h.b16 %v46
    %v114 = vunpack.c.l.b16 %v47
    %v115 = vunpack.c.h.b16 %v47
    %v116 = vunpack.c.l.b16 %v48
    %v117 = vunpack.c.h.b16 %v48
    %v118 = vunpack.c.l.b16 %v49
    %v119 = vunpack.c.h.b16 %v49
    %v120 = vunpack.c.l.b16 %v50
    %v121 = vunpack.c.h.b16 %v50
    %v122 = vunpack.c.l.b16 %v51
    %v123 = vunpack.c.h.b16 %v51
    %v124 = vunpack.c.l.b16 %v52
    %v125 = vunpack.c.h.b16 %v52
    %v126 = vunpack.c.l.b16 %v53
    %v127 = vunpack.c.h.b16 %v53
    %v128 = vunpack.c.l.b16 %v54
    %v129 = vunpack.c.h.b16 %v54
    %v130 = vunpack.c.l.b16 %v55
    %v131 = vunpack.c.h.b16 %v55
    %v132 = vunpack.c.l.b16 %v56
    %v133 = vunpack.c.h.b16 %v56
    %v134 = vunpack.c.l.b16 %v57
    %v135 = vunpack.c.h.b16 %v57
    %v136 = vunpack.c.l.b16 %v58
    %v137 = vunpack.c.h.b16 %v58
    %v138 = vunpack.c.l.b16 %v59
    %v139 = vunpack.c.h.b16 %v59
    %v140 = vpack.c.b16 %v110, %v108
    %v141 = vpack.c.b16 %v111, %v109
    %v142 = vpack.c.b16 %v114, %v112
    %v143 = vpack.c.b16 %v115, %v113
    %v144 = vpack.c.b16 %v118, %v116
    %v145 = vpack.c.b16 %v119, %v117
    %v146 = vpack.c.b16 %v122, %v120
    %v147 = vpack.c.b16 %v123, %v121
    %v148 = vpack.c.b16 %v126, %v124
    %v149 = vpack.c.b16 %v127, %v125
    %v150 = vpack.c.b16 %v130, %v128
    %v151 = vpack.c.b16 %v131, %v129
    %v152 = vpack.c.b16 %v134, %v132
    %v153 = vpack.c.b16 %v135, %v133
    %v154 = vpack.c.b16 %v138, %v136
    %v155 = vpack.c.b16 %v139, %v137
    %v189 = vunpack.c.l.b16 %v60
    %v190 = vunpack.c.l.b16 %v61
    %v191 = vunpack.c.l.b16 %v62
    %v192 = vunpack.c.l.b16 %v63
    %v193 = vunpack.c.l.b16 %v64
    %v194 = vunpack.c.l.b16 %v65
    %v195 = vunpack.c.l.b16 %v66
    %v196 = vunpack.c.l.b16 %v67
    %v197 = vunpack.c.l.b16 %v68
    %v198 = vunpack.c.l.b16 %v69
    %v199 = vunpack.c.l.b16 %v70
    %v200 = vunpack.c.l.b16 %v71
    %v201 = vunpack.c.l.b16 %v72
    %v202 = vunpack.c.l.b16 %v73
    %v203 = vunpack.c.l.b16 %v74
    %v204 = vunpack.c.l.b16 %v75
    %v205 = vunpack.c.l.b16 %v76
    %v206 = vunpack.c.l.b16 %v77
    %v207 = vunpack.c.l.b16 %v78
    %v208 = vunpack.c.l.b16 %v79
    %v209 = vunpack.c.l.b16 %v80
    %v210 = vunpack.c.l.b16 %v81
    %v211 = vunpack.c.l.b16 %v82
    %v212 = vunpack.c.l.b16 %v83
    %v213 = vunpack.c.l.b16 %v84
    %v214 = vpack.c.b16 %v190, %v189
    %v215 = vpack.c.b16 %v192, %v191
    %v216 = vpack.c.b16 %v194, %v193
    %v217 = vpack.c.b16 %v196, %v195
    %v218 = vpack.c.b16 %v198, %v197
    %v219 = vpack.c.b16 %v200, %v199
    %v220 = vpack.c.b16 %v202, %v201
    %v221 = vpack.c.b16 %v204, %v203
    %v222 = vpack.c.b16 %v206, %v205
    %v223 = vpack.c.b16 %v208, %v207
    %v224 = vpack.c.b16 %v210, %v209
    %v225 = vpack.c.b16 %v212, %v211
    %v226 = vpack.c.b16 %v213, %v213
    %vm239 = vcmask 556032
    %v241 = vsel %vm239, %v141, 0
    %v244 = vsel %vm239, %v143, 0
    %v247 = vsel %vm239, %v145, 0
    %v250 = vsel %vm239, %v147, 0
    %v253 = vsel %vm239, %v149, 0
    %v256 = vsel %vm239, %v151, 0
    %v259 = vsel %vm239, %v153, 0
    %v262 = vsel %vm239, %v155, 0
    %vm264 = vcmask 1041408
    %v266 = vsel %vm264, %v226, 0
    %268 = vmatprep.subr.bf16.mxu0 0
    %269 = vmatpush1.bf16.msra.mxu0 %v214
    %270 = vmatprep.subr.bf16.mxu0 0
    %271 = vmatpush1.bf16.msra.mxu0 %v215
    %272 = vmatprep.subr.bf16.mxu0 0
    %273 = vmatpush1.bf16.msra.mxu0 %v216
    %274 = vmatprep.subr.bf16.mxu0 0
    %275 = vmatpush1.bf16.msra.mxu0 %v217
    %276 = vmatprep.subr.bf16.mxu0 0
    %277 = vmatpush1.bf16.msra.mxu0 %v218
    %278 = vmatprep.subr.bf16.mxu0 0
    %279 = vmatpush1.bf16.msra.mxu0 %v219
    %280 = vmatprep.subr.bf16.mxu0 0
    %281 = vmatpush1.bf16.msra.mxu0 %v220
    %282 = vmatprep.subr.bf16.mxu0 0
    %283 = vmatpush1.bf16.msra.mxu0 %v221
    %284 = vmatprep.subr.bf16.mxu0 0
    %285 = vmatpush1.bf16.msra.mxu0 %v222
    %286 = vmatprep.subr.bf16.mxu0 0
    %287 = vmatpush1.bf16.msra.mxu0 %v223
    %288 = vmatprep.subr.bf16.mxu0 0
    %289 = vmatpush1.bf16.msra.mxu0 %v224
    %290 = vmatprep.subr.bf16.mxu0 0
    %291 = vmatpush1.bf16.msra.mxu0 %v225
    %292 = vmatprep.subr.bf16.mxu0 0
    %293 = vmatpush1.bf16.msra.mxu0 %v266
    %294 = vmatprep.subr.bf16.mxu0 0
    %295 = vmatpush1.bf16.msra.mxu0 0
    %296 = vmatprep.subr.bf16.mxu0 0
    %297 = vmatpush1.bf16.msra.mxu0 0
    %298 = vmatprep.subr.bf16.mxu0 0
    %299 = vmatpush1.bf16.msra.mxu0 0
    %300 = vmatprep.mubr.bf16.mxu0 %v241
    %301 = vmatmul.mubr.bf16.gmra.mrb[0].mxu0 %v140
    %v302 = vpop.f32.mrb[0].mxu0
    %v303 = vadd.f32 %v90, %v302
    %v304 = vpop.f32.mrb[0].mxu0
    %v305 = vpop.f32.mrb[0].mxu0
    %v306 = vadd.f32 %v90, %v305
    %v307 = vpop.f32.mrb[0].mxu0
    %308 = vmatprep.mubr.bf16.mxu0 %v244
    %309 = vmatmul.mubr.bf16.gmra.mrb[0].mxu0 %v142
    %v310 = vpop.f32.mrb[0].mxu0
    %v311 = vadd.f32 %v90, %v310
    %v312 = vpop.f32.mrb[0].mxu0
    %v313 = vpop.f32.mrb[0].mxu0
    %v314 = vadd.f32 %v90, %v313
    %v315 = vpop.f32.mrb[0].mxu0
    %316 = vmatprep.mubr.bf16.mxu0 %v247
    %317 = vmatmul.mubr.bf16.gmra.mrb[0].mxu0 %v144
    %v318 = vpop.f32.mrb[0].mxu0
    %v319 = vadd.f32 %v90, %v318
    %v320 = vpop.f32.mrb[0].mxu0
    %v321 = vpop.f32.mrb[0].mxu0
    %v322 = vadd.f32 %v90, %v321
    %v323 = vpop.f32.mrb[0].mxu0
    %324 = vmatprep.mubr.bf16.mxu0 %v250
    %325 = vmatmul.mubr.bf16.gmra.mrb[0].mxu0 %v146
    %v326 = vpop.f32.mrb[0].mxu0
    %v327 = vadd.f32 %v90, %v326
    %v328 = vpop.f32.mrb[0].mxu0
    %v329 = vpop.f32.mrb[0].mxu0
    %v330 = vadd.f32 %v90, %v329
    %v331 = vpop.f32.mrb[0].mxu0
    %332 = vmatprep.mubr.bf16.mxu0 %v253
    %333 = vmatmul.mubr.bf16.gmra.mrb[0].mxu0 %v148
    %v334 = vpop.f32.mrb[0].mxu0
    %v335 = vadd.f32 %v90, %v334
    %v336 = vpop.f32.mrb[0].mxu0
    %v337 = vpop.f32.mrb[0].mxu0
    %v338 = vadd.f32 %v90, %v337
    %v339 = vpop.f32.mrb[0].mxu0
    %340 = vmatprep.mubr.bf16.mxu0 %v256
    %341 = vmatmul.mubr.bf16.gmra.mrb[0].mxu0 %v150
    %v342 = vpop.f32.mrb[0].mxu0
    %v343 = vadd.f32 %v90, %v342
    %v344 = vpop.f32.mrb[0].mxu0
    %v345 = vpop.f32.mrb[0].mxu0
    %v346 = vadd.f32 %v90, %v345
    %v347 = vpop.f32.mrb[0].mxu0
    %348 = vmatprep.mubr.bf16.mxu0 %v259
    %349 = vmatmul.mubr.bf16.gmra.mrb[0].mxu0 %v152
    %v350 = vpop.f32.mrb[0].mxu0
    %v351 = vadd.f32 %v90, %v350
    %v352 = vpop.f32.mrb[0].mxu0
    %v353 = vpop.f32.mrb[0].mxu0
    %v354 = vadd.f32 %v90, %v353
    %v355 = vpop.f32.mrb[0].mxu0
    %356 = vmatprep.mubr.bf16.mxu0 %v262
    %357 = vmatmul.mubr.bf16.gmra.mrb[0].mxu0 %v154
    %v358 = vpop.f32.mrb[0].mxu0
    %v359 = vadd.f32 %v90, %v358
    %v360 = vpop.f32.mrb[0].mxu0
    %v361 = vpop.f32.mrb[0].mxu0
    %v362 = vadd.f32 %v90, %v361
    %v363 = vpop.f32.mrb[0].mxu0
    %364 = vdwg.mxu0
    %v365 = vpack.c.bf16 %v306, %v303
    %v366 = vpack.c.bf16 %v314, %v311
    %v367 = vpack.c.bf16 %v322, %v319
    %v368 = vpack.c.bf16 %v330, %v327
    %v369 = vpack.c.bf16 %v338, %v335
    %v370 = vpack.c.bf16 %v346, %v343
    %v371 = vpack.c.bf16 %v354, %v351
    %v372 = vpack.c.bf16 %v362, %v359
    %v381 = vunpack.c.l.b16 %v365
    %v382 = vunpack.c.h.b16 %v365
    %v383 = vunpack.c.l.b16 %v366
    %v384 = vunpack.c.h.b16 %v366
    %v385 = vunpack.c.l.b16 %v367
    %v386 = vunpack.c.h.b16 %v367
    %v387 = vunpack.c.l.b16 %v368
    %v388 = vunpack.c.h.b16 %v368
    %v389 = vunpack.c.l.b16 %v369
    %v390 = vunpack.c.h.b16 %v369
    %v391 = vunpack.c.l.b16 %v370
    %v392 = vunpack.c.h.b16 %v370
    %v393 = vunpack.c.l.b16 %v371
    %v394 = vunpack.c.h.b16 %v371
    %v395 = vunpack.c.l.b16 %v372
    %v396 = vunpack.c.h.b16 %v372
    %v397 = vpack.c.b16 %v381, %v381
    %v398 = vpack.c.b16 %v382, %v382
    %v399 = vpack.c.b16 %v383, %v383
    %v400 = vpack.c.b16 %v384, %v384
    %v401 = vpack.c.b16 %v385, %v385
    %v402 = vpack.c.b16 %v386, %v386
    %v403 = vpack.c.b16 %v387, %v387
    %v404 = vpack.c.b16 %v388, %v388
    %v405 = vpack.c.b16 %v389, %v389
    %v406 = vpack.c.b16 %v390, %v390
    %v407 = vpack.c.b16 %v391, %v391
    %v408 = vpack.c.b16 %v392, %v392
    %v409 = vpack.c.b16 %v393, %v393
    %v410 = vpack.c.b16 %v394, %v394
    %v411 = vpack.c.b16 %v395, %v395
    %v412 = vpack.c.b16 %v396, %v396
    %429 = vst [vmem:[#allocation7] sm:$0xf] %v397
    %430 = vst [vmem:[#allocation7 + $0x4] sm:$0xf] %v398
    %431 = vst [vmem:[#allocation7 + $0x8] sm:$0xf] %v399
    %432 = vst [vmem:[#allocation7 + $0xc] sm:$0xf] %v400
    %433 = vst [vmem:[#allocation7 + $0x10] sm:$0xf] %v401
    %434 = vst [vmem:[#allocation7 + $0x14] sm:$0xf] %v402
    %435 = vst [vmem:[#allocation7 + $0x18] sm:$0xf] %v403
    %436 = vst [vmem:[#allocation7 + $0x1c] sm:$0xf] %v404
    %437 = vst [vmem:[#allocation7 + $0x20] sm:$0xf] %v405
    %438 = vst [vmem:[#allocation7 + $0x24] sm:$0xf] %v406
    %439 = vst [vmem:[#allocation7 + $0x28] sm:$0xf] %v407
    %440 = vst [vmem:[#allocation7 + $0x2c] sm:$0xf] %v408
    %441 = vst [vmem:[#allocation7 + $0x30] sm:$0xf] %v409
    %442 = vst [vmem:[#allocation7 + $0x34] sm:$0xf] %v410
    %443 = vst [vmem:[#allocation7 + $0x38] sm:$0xf] %v411
    %444 = vst [vmem:[#allocation7 + $0x3c] sm:$0xf] %v412
    // Predicated region
    $region22: #{tpu_custom_call.1} parent=1 // pred_check
      _
    $region23: #{tpu_custom_call.1} parent=1 // pred_check_branch
      %446 = sbr.rel (0) target = $region25
    $region24: #{tpu_custom_call.1} parent=1 // pred_region
      %s448 = ssub.s32 1024, 256
      %449 = vsyncadd [#allocation4], %s448
      %s450 = sshll.u32 [#allocation7], 4
      %s451 = int_to_ptr.vmem [resolvable:$true] %s450
      %456 = dma.vmem_to_hbm [thread:$0]  %s451, 256, %s3, [#allocation4], 64, 64, 4
    $region25: #{tpu_custom_call.1} parent=1 // pred_fallthru
      _
    // Predicated region
    $region26: #{tpu_custom_call.1} parent=1 // pred_check
      _
    $region27: #{tpu_custom_call.1} parent=1 // pred_check_branch
      %458 = sbr.rel (0) target = $region29
    $region28: #{tpu_custom_call.1} parent=1 // pred_region
      %459 = dma.done [#allocation4], 1024
    $region29: #{tpu_custom_call.1} parent=1 // pred_fallthru
      _
    %460 = vsyncpa [#allocation3], 1
    %461 = vsyncpa [#allocation6], 1
    %462 = vsyncpa [#allocation4], 1

</llo_original>
